<compile_context>
chip_gen: v7x
topology: tpu7x:2x2x1
jax: 0.10.0
libtpu: 0.0.40
codegen_flags: <defaults>
</compile_context>

<pallas_src>
import functools

import jax
import jax.numpy as jnp
from jax.experimental import pallas as pl
from jax.experimental.pallas import tpu as pltpu


def _mlp_kernel(xT_ref, w1_ref, b1_ref, w2_ref, b2_ref, w3_ref, b3_ref, o_ref,
                *, compute_dtype):
    """Fused forward for one batch tile, batch-on-lanes:
       out^T = W3 @ relu(W2 @ relu(W1 @ x^T + b1) + b2) + b3."""
    xT = xT_ref[...].astype(compute_dtype)                      # [in, TB]

    # Layer 1: MXU matmul (bf16 or f32 operands), f32 accumulation.
    h = jnp.dot(w1_ref[...], xT,
                preferred_element_type=jnp.float32) + b1_ref[...]   # [fc1, TB]
    h = jnp.maximum(h, 0.0)

    # Layer 2.
    h = jnp.dot(w2_ref[...], h.astype(compute_dtype),
                preferred_element_type=jnp.float32) + b2_ref[...]   # [fc2, TB]
    h = jnp.maximum(h, 0.0)

    # Layer 3 (head).  Output block is [n_actions, TILE_B]: lane-dense store
    # (only the sublane dim is small, which is a one-shot partial at the end).
    out = jnp.dot(w3_ref[...], h.astype(compute_dtype),
                  preferred_element_type=jnp.float32) + b3_ref[...]  # [na, TB]
    o_ref[...] = out.astype(o_ref.dtype)


def _round_up(a, m):
    return ((a + m - 1) // m) * m


def generic_network_forward(x, params, *, compute_dtype=jnp.bfloat16,
                            max_tile_b=4096,
                            vmem_budget_bytes=48 * 1024 * 1024):
    """Run the fused MLP kernel.  x: [B, input_dims] float32 -> [B, n_actions]."""
    w1, b1, w2, b2, w3, b3 = params          # PyTorch layout: W [fan_out, fan_in]
    batch, in_dims = x.shape
    fc1 = w1.shape[0]
    fc2 = w2.shape[0]
    n_actions = w3.shape[0]

    # Cast MXU weight operands once (halves weight DMA traffic for bf16);
    # biases stay f32 because the add happens on the f32 accumulator.
    w1c = w1.astype(compute_dtype)
    w2c = w2.astype(compute_dtype)
    w3c = w3.astype(compute_dtype)

    # --- batch-tile selection (multiples of 256) under a VMEM budget --------
    w_item = jnp.dtype(compute_dtype).itemsize
    LANE_TILE = 256                              # v6e/v7x MXU-native, 128-lane ok

    def vmem_estimate(tb):
        weights = w_item * (fc1 * in_dims + fc2 * fc1 + n_actions * fc2)
        biases = 4 * (fc1 + fc2 + n_actions)
        io = 4 * tb * (in_dims + n_actions)
        # Pallas double-buffers every pipelined block, even constant-index ones.
        pipelined = 2 * (weights + biases + io)
        # In-kernel f32 intermediates + casted copies.
        acts = tb * (4 + w_item) * (fc1 + fc2) + tb * w_item * in_dims
        return pipelined + acts

    max_tile_b = max(LANE_TILE, (max_tile_b // LANE_TILE) * LANE_TILE)
    tile_b = min(max_tile_b, _round_up(batch, LANE_TILE))
    while tile_b > LANE_TILE and vmem_estimate(tile_b) > vmem_budget_bytes:
        tile_b = max(LANE_TILE, _round_up(tile_b // 2, LANE_TILE))

    batch_p = _round_up(batch, tile_b)

    # Transpose once in the wrapper so the per-tile input DMA is contiguous
    # rows of tile_b*4 bytes; pad the (lane) batch axis to a tile multiple.
    xT = x.T                                                     # [in, B]
    if batch_p != batch:
        xT = jnp.pad(xT, ((0, 0), (0, batch_p - batch)))
    grid = (batch_p // tile_b,)

    grid_spec = pltpu.PrefetchScalarGridSpec(
        num_scalar_prefetch=0,
        grid=grid,
        in_specs=[
            # x^T tile: streams through VMEM, double-buffered by the pipeline.
            pl.BlockSpec((in_dims, tile_b), lambda i: (0, i)),
            # Weights / biases: constant index_map -> resident across steps.
            pl.BlockSpec((fc1, in_dims), lambda i: (0, 0)),
            pl.BlockSpec((fc1, 1), lambda i: (0, 0)),
            pl.BlockSpec((fc2, fc1), lambda i: (0, 0)),
            pl.BlockSpec((fc2, 1), lambda i: (0, 0)),
            pl.BlockSpec((n_actions, fc2), lambda i: (0, 0)),
            pl.BlockSpec((n_actions, 1), lambda i: (0, 0)),
        ],
        out_specs=pl.BlockSpec((n_actions, tile_b), lambda i: (0, i)),
    )

    outT = pl.pallas_call(
        functools.partial(_mlp_kernel, compute_dtype=compute_dtype),
        out_shape=jax.ShapeDtypeStruct((n_actions, batch_p), jnp.float32),
        grid_spec=grid_spec,
        compiler_params=pltpu.CompilerParams(
            # Batch tiles are independent -> shard across v7x's 2 TensorCores.
            dimension_semantics=("parallel",),
            vmem_limit_bytes=int(vmem_budget_bytes),
        ),
    )(xT, w1c, b1, w2c, b2, w3c, b3)

    return outT[:, :batch].T                                     # [B, n_actions]


def init_params(key, input_dims, fc1_dims, fc2_dims, n_actions):
    """nn.Linear-style init: U(-1/sqrt(fan_in), 1/sqrt(fan_in)).
    Weights stay in PyTorch layout [fan_out, fan_in]; biases are [fan_out, 1]."""
    def linear(k, fan_in, fan_out):
        kw, kb = jax.random.split(k)
        bound = 1.0 / jnp.sqrt(jnp.float32(fan_in))
        w = jax.random.uniform(kw, (fan_out, fan_in), jnp.float32, -bound, bound)
        b = jax.random.uniform(kb, (fan_out, 1), jnp.float32, -bound, bound)
        return w, b

    k1, k2, k3 = jax.random.split(key, 3)
    w1, b1 = linear(k1, input_dims, fc1_dims)
    w2, b2 = linear(k2, fc1_dims, fc2_dims)
    w3, b3 = linear(k3, fc2_dims, n_actions)
    return (w1, b1, w2, b2, w3, b3)


def _reference_forward(x, params, compute_dtype):
    """Pure-JAX reference (x @ W^T + b) with the same mixed-precision semantics."""
    w1, b1, w2, b2, w3, b3 = params

    def lin(a, w, b):
        y = jnp.dot(a.astype(compute_dtype), w.T.astype(compute_dtype),
                    preferred_element_type=jnp.float32)
        return y + b.reshape(1, -1)

    h = jnp.maximum(lin(x, w1, b1), 0.0)
    h = jnp.maximum(lin(h, w2, b2), 0.0)
    return lin(h, w3, b3)


# TODO(synk): the Adam optimizer / .to(device) / torch.tensor conversion in the
# PyTorch module are host-side training & placement concerns, not forward ops.

if __name__ == "__main__":
    # CartPole-like sizes: obs dim 4, two hidden layers of 32, 2 actions.
    batch = 8
    input_dims = 4
    fc1_dims = 32
    fc2_dims = 32
    n_actions = 2

    key = jax.random.PRNGKey(0)
    k_params, k_x = jax.random.split(key)
    params = init_params(k_params, input_dims, fc1_dims, fc2_dims, n_actions)
    x = jax.random.normal(k_x, (batch, input_dims), dtype=jnp.float32)

    # 1) Exact-semantics check in f32 (matches the PyTorch forward up to
    #    float rounding).
    out_f32 = jax.block_until_ready(
        generic_network_forward(x, params, compute_dtype=jnp.float32))
    ref_f32 = _reference_forward(x, params, jnp.float32)
    assert out_f32.shape == (batch, n_actions)
    assert jnp.allclose(out_f32, ref_f32, atol=1e-5, rtol=1e-5)

    # 2) Default perf path: bf16 MXU operands, f32 accumulation.
    out_bf16 = jax.block_until_ready(generic_network_forward(x, params))
    ref_bf16 = _reference_forward(x, params, jnp.bfloat16)
    assert jnp.allclose(out_bf16, ref_bf16, atol=1e-2, rtol=1e-2)

    # 3) Exercise a multi-step batch grid + padding (batch not a tile multiple):
    #    600 rows with max_tile_b=256 -> 3 grid steps, padded to 768.
    k_big = jax.random.fold_in(k_x, 1)
    x_big = jax.random.normal(k_big, (600, input_dims), dtype=jnp.float32)
    out_big = jax.block_until_ready(
        generic_network_forward(x_big, params, compute_dtype=jnp.float32,
                                max_tile_b=256))
    ref_big = _reference_forward(x_big, params, jnp.float32)
    assert out_big.shape == (600, n_actions)
    assert jnp.allclose(out_big, ref_big, atol=1e-5, rtol=1e-5)

    print("KERNEL_OK")
</pallas_src>

<mosaic_0001>
module attributes {stable_mosaic.version = 11 : i64} {
  func.func @_mlp_kernel(%arg0: i32, %arg1: memref<4x256xf32, #tpu.memory_space<vmem>>, %arg2: memref<32x4xf32, #tpu.memory_space<vmem>>, %arg3: memref<32x1xf32, #tpu.memory_space<vmem>>, %arg4: memref<32x32xf32, #tpu.memory_space<vmem>>, %arg5: memref<32x1xf32, #tpu.memory_space<vmem>>, %arg6: memref<2x32xf32, #tpu.memory_space<vmem>>, %arg7: memref<2x1xf32, #tpu.memory_space<vmem>>, %arg8: memref<2x256xf32, #tpu.memory_space<vmem>>) attributes {dimension_semantics = [#tpu.dimension_semantics<parallel>], iteration_bounds = array<i64: 1>, scalar_prefetch = 0 : i64, scratch_operands = 0 : i64, tpu.core_type = #tpu.core_type<tc>, window_params = [{transform_indices = @transform_0, window_bounds = array<i64: 4, 256>}, {pipeline_mode = #tpu.pipeline_mode<synchronous>, transform_indices = @transform_1, window_bounds = array<i64: 32, 4>}, {pipeline_mode = #tpu.pipeline_mode<synchronous>, transform_indices = @transform_2, window_bounds = array<i64: 32, 1>}, {pipeline_mode = #tpu.pipeline_mode<synchronous>, transform_indices = @transform_3, window_bounds = array<i64: 32, 32>}, {pipeline_mode = #tpu.pipeline_mode<synchronous>, transform_indices = @transform_4, window_bounds = array<i64: 32, 1>}, {pipeline_mode = #tpu.pipeline_mode<synchronous>, transform_indices = @transform_5, window_bounds = array<i64: 2, 32>}, {pipeline_mode = #tpu.pipeline_mode<synchronous>, transform_indices = @transform_6, window_bounds = array<i64: 2, 1>}, {transform_indices = @transform_7, window_bounds = array<i64: 2, 256>}]} {
    %c0 = arith.constant 0 : index
    %c0_0 = arith.constant 0 : index
    %0 = vector.load %arg1[%c0, %c0_0] : memref<4x256xf32, #tpu.memory_space<vmem>>, vector<4x256xf32>
    %c0_1 = arith.constant 0 : index
    %c0_2 = arith.constant 0 : index
    %1 = vector.load %arg2[%c0_1, %c0_2] : memref<32x4xf32, #tpu.memory_space<vmem>>, vector<32x4xf32>
    %cst = arith.constant dense<0.000000e+00> : vector<32x256xf32>
    %2 = tpu.matmul %1, %0, %cst {dimension_numbers = #tpu.dot_dimension_numbers<[1], [0], [0], [1], [0, 0, 1, 1], [], []>} : vector<32x4xf32>, vector<4x256xf32>, vector<32x256xf32> -> vector<32x256xf32>
    %c0_3 = arith.constant 0 : index
    %c0_4 = arith.constant 0 : index
    %3 = vector.load %arg3[%c0_3, %c0_4] : memref<32x1xf32, #tpu.memory_space<vmem>>, vector<32x1xf32>
    %4 = vector.broadcast %3 : vector<32x1xf32> to vector<32x256xf32>
    %5 = arith.addf %2, %4 : vector<32x256xf32>
    %cst_5 = arith.constant 0.000000e+00 : f32
    %6 = vector.broadcast %cst_5 : f32 to vector<32x256xf32>
    %7 = arith.maximumf %5, %6 : vector<32x256xf32>
    %c0_6 = arith.constant 0 : index
    %c0_7 = arith.constant 0 : index
    %8 = vector.load %arg4[%c0_6, %c0_7] : memref<32x32xf32, #tpu.memory_space<vmem>>, vector<32x32xf32>
    %cst_8 = arith.constant dense<0.000000e+00> : vector<32x256xf32>
    %9 = tpu.matmul %8, %7, %cst_8 {dimension_numbers = #tpu.dot_dimension_numbers<[1], [0], [0], [1], [0, 0, 1, 1], [], []>} : vector<32x32xf32>, vector<32x256xf32>, vector<32x256xf32> -> vector<32x256xf32>
    %c0_9 = arith.constant 0 : index
    %c0_10 = arith.constant 0 : index
    %10 = vector.load %arg5[%c0_9, %c0_10] : memref<32x1xf32, #tpu.memory_space<vmem>>, vector<32x1xf32>
    %11 = vector.broadcast %10 : vector<32x1xf32> to vector<32x256xf32>
    %12 = arith.addf %9, %11 : vector<32x256xf32>
    %cst_11 = arith.constant 0.000000e+00 : f32
    %13 = vector.broadcast %cst_11 : f32 to vector<32x256xf32>
    %14 = arith.maximumf %12, %13 : vector<32x256xf32>
    %c0_12 = arith.constant 0 : index
    %c0_13 = arith.constant 0 : index
    %15 = vector.load %arg6[%c0_12, %c0_13] : memref<2x32xf32, #tpu.memory_space<vmem>>, vector<2x32xf32>
    %cst_14 = arith.constant dense<0.000000e+00> : vector<2x256xf32>
    %16 = tpu.matmul %15, %14, %cst_14 {dimension_numbers = #tpu.dot_dimension_numbers<[1], [0], [0], [1], [0, 0, 1, 1], [], []>} : vector<2x32xf32>, vector<32x256xf32>, vector<2x256xf32> -> vector<2x256xf32>
    %c0_15 = arith.constant 0 : index
    %c0_16 = arith.constant 0 : index
    %17 = vector.load %arg7[%c0_15, %c0_16] : memref<2x1xf32, #tpu.memory_space<vmem>>, vector<2x1xf32>
    %18 = vector.broadcast %17 : vector<2x1xf32> to vector<2x256xf32>
    %19 = arith.addf %16, %18 : vector<2x256xf32>
    %c0_17 = arith.constant 0 : index
    %c0_18 = arith.constant 0 : index
    %20 = vector.load %arg8[%c0_17, %c0_18] : memref<2x256xf32, #tpu.memory_space<vmem>>, vector<2x256xf32>
    tpu.vector_store %arg8[%c0_17, %c0_18], %19 {strides = array<i32>} : memref<2x256xf32, #tpu.memory_space<vmem>>, vector<2x256xf32>,
    return
  }
  func.func @transform_0(%arg0: i32) -> (i32, i32) {
    %c0_i32 = arith.constant 0 : i32
    %c0_i32_0 = arith.constant 0 : i32
    return %c0_i32, %arg0 : i32, i32
  }
  func.func @transform_1(%arg0: i32) -> (i32, i32) {
    %c0_i32 = arith.constant 0 : i32
    %c0_i32_0 = arith.constant 0 : i32
    %c0_i32_1 = arith.constant 0 : i32
    return %c0_i32, %c0_i32_0 : i32, i32
  }
  func.func @transform_2(%arg0: i32) -> (i32, i32) {
    %c0_i32 = arith.constant 0 : i32
    %c0_i32_0 = arith.constant 0 : i32
    %c0_i32_1 = arith.constant 0 : i32
    return %c0_i32, %c0_i32_0 : i32, i32
  }
  func.func @transform_3(%arg0: i32) -> (i32, i32) {
    %c0_i32 = arith.constant 0 : i32
    %c0_i32_0 = arith.constant 0 : i32
    %c0_i32_1 = arith.constant 0 : i32
    return %c0_i32, %c0_i32_0 : i32, i32
  }
  func.func @transform_4(%arg0: i32) -> (i32, i32) {
    %c0_i32 = arith.constant 0 : i32
    %c0_i32_0 = arith.constant 0 : i32
    %c0_i32_1 = arith.constant 0 : i32
    return %c0_i32, %c0_i32_0 : i32, i32
  }
  func.func @transform_5(%arg0: i32) -> (i32, i32) {
    %c0_i32 = arith.constant 0 : i32
    %c0_i32_0 = arith.constant 0 : i32
    %c0_i32_1 = arith.constant 0 : i32
    return %c0_i32, %c0_i32_0 : i32, i32
  }
  func.func @transform_6(%arg0: i32) -> (i32, i32) {
    %c0_i32 = arith.constant 0 : i32
    %c0_i32_0 = arith.constant 0 : i32
    %c0_i32_1 = arith.constant 0 : i32
    return %c0_i32, %c0_i32_0 : i32, i32
  }
  func.func @transform_7(%arg0: i32) -> (i32, i32) {
    %c0_i32 = arith.constant 0 : i32
    %c0_i32_0 = arith.constant 0 : i32
    return %c0_i32, %arg0 : i32, i32
  }
}

</mosaic_0001>

<llo_original>
// kernel: tpu_custom_call.1
$region0: #{tpu_custom_call.1}
  #allocation0 [shape = 'u32[]', space=smem, size = 0x4, offset = 0x4, fixed_abs, tag = 'smem constant byte address 0x4 - core index']
  #allocation1 [shape = 'u32[144,128]{1,0:T(1,128)}', space=vmem, size = 0x12000, scoped, tag = 'internal scratch']
  %s0 = inlined_call_operand.vmem [shape: f32[4,256], index: 0, kind: input, shape index: {}]
  %s1 = inlined_call_operand.vmem [shape: f32[32,4], index: 1, kind: input, shape index: {}]
  %s2 = inlined_call_operand.vmem [shape: f32[32,1], index: 2, kind: input, shape index: {}]
  %s3 = inlined_call_operand.vmem [shape: f32[32,32], index: 3, kind: input, shape index: {}]
  %s4 = inlined_call_operand.vmem [shape: f32[32,1], index: 4, kind: input, shape index: {}]
  %s5 = inlined_call_operand.vmem [shape: f32[2,32], index: 5, kind: input, shape index: {}]
  %s6 = inlined_call_operand.vmem [shape: f32[2,1], index: 6, kind: input, shape index: {}]
  %s7 = inlined_call_operand.hbm [shape: f32[2,256], index: 7, kind: output, shape index: {}]
  %s8 = sld [smem:[#allocation0]]
  $region38: #{tpu_custom_call.1} parent=0
    _
  %s10 = ssub.s32 1, %s8
  %s11 = scalar_select 0, %s10, %s8
  $region1: #{tpu_custom_call.1} parent=0
    #allocation2 [shape = 'u8[2048]{0}', space=vmem, size = 0x800, scoped, tag = 'output window, operand 0, single buffered']
    #allocation3 [shape = 's32[1]{0}', space=sflag, size = 0x4, scoped, tag = 'scoped memory for tpu_custom_call.1']
    %12 = vsyncpa [#allocation3], 0
    // Predicated region
    $region2: #{tpu_custom_call.1} parent=1 // pred_check
      _
    $region3: #{tpu_custom_call.1} parent=1 // pred_check_branch
      %14 = sbr.rel (0) target = $region5
    $region4: #{tpu_custom_call.1} parent=1 // pred_region
      _
    $region5: #{tpu_custom_call.1} parent=1 // pred_fallthru
      _
    // Predicated region
    $region6: #{tpu_custom_call.1} parent=1 // pred_check
      _
    $region7: #{tpu_custom_call.1} parent=1 // pred_check_branch
      %16 = sbr.rel (0) target = $region9
    $region8: #{tpu_custom_call.1} parent=1 // pred_region
      _
    $region9: #{tpu_custom_call.1} parent=1 // pred_fallthru
      _
    // Predicated region
    $region10: #{tpu_custom_call.1} parent=1 // pred_check
      _
    $region11: #{tpu_custom_call.1} parent=1 // pred_check_branch
      %18 = sbr.rel (0) target = $region13
    $region12: #{tpu_custom_call.1} parent=1 // pred_region
      _
    $region13: #{tpu_custom_call.1} parent=1 // pred_fallthru
      _
    // Predicated region
    $region14: #{tpu_custom_call.1} parent=1 // pred_check
      _
    $region15: #{tpu_custom_call.1} parent=1 // pred_check_branch
      %20 = sbr.rel (0) target = $region17
    $region16: #{tpu_custom_call.1} parent=1 // pred_region
      _
    $region17: #{tpu_custom_call.1} parent=1 // pred_fallthru
      _
    // Predicated region
    $region18: #{tpu_custom_call.1} parent=1 // pred_check
      _
    $region19: #{tpu_custom_call.1} parent=1 // pred_check_branch
      %22 = sbr.rel (0) target = $region21
    $region20: #{tpu_custom_call.1} parent=1 // pred_region
      _
    $region21: #{tpu_custom_call.1} parent=1 // pred_fallthru
      _
    // Predicated region
    $region22: #{tpu_custom_call.1} parent=1 // pred_check
      _
    $region23: #{tpu_custom_call.1} parent=1 // pred_check_branch
      %24 = sbr.rel (0) target = $region25
    $region24: #{tpu_custom_call.1} parent=1 // pred_region
      _
    $region25: #{tpu_custom_call.1} parent=1 // pred_fallthru
      _
    // Predicated region
    $region26: #{tpu_custom_call.1} parent=1 // pred_check
      _
    $region27: #{tpu_custom_call.1} parent=1 // pred_check_branch
      %26 = sbr.rel (0) target = $region29
    $region28: #{tpu_custom_call.1} parent=1 // pred_region
      _
    $region29: #{tpu_custom_call.1} parent=1 // pred_fallthru
      _
    %v27 = vld [vmem:[%s0] sm:$0xff]
    %v28 = vld [vmem:[%s1] sm:$0xff]
    %v29 = vld [vmem:[%s1 + $0x8] sm:$0xff]
    %v30 = vld [vmem:[%s1 + $0x10] sm:$0xff]
    %v31 = vld [vmem:[%s1 + $0x18] sm:$0xff]
    %v32 = vld [vmem:[%s2] sm:$0xff]
    %v33 = vld [vmem:[%s2 + $0x8] sm:$0xff]
    %v34 = vld [vmem:[%s2 + $0x10] sm:$0xff]
    %v35 = vld [vmem:[%s2 + $0x18] sm:$0xff]
    %37 = vset.pattern.permute.xlu0 0
    %38 = vperm.xlu0 %37, %v32
    %v39 = vpop.permute.xlu0 %38
    %42 = vset.pattern.permute.xlu0 0
    %43 = vperm.xlu0 %42, %v33
    %v44 = vpop.permute.xlu0 %43
    %47 = vset.pattern.permute.xlu0 0
    %48 = vperm.xlu0 %47, %v34
    %v49 = vpop.permute.xlu0 %48
    %52 = vset.pattern.permute.xlu0 0
    %53 = vperm.xlu0 %52, %v35
    %v54 = vpop.permute.xlu0 %53
    %v57 = vcombine.high %v27, %v27
    %vm58 = vcmask 31744
    %v60 = vsel %vm58, %v28, 0
    %v63 = vsel %vm58, %v29, 0
    %v66 = vsel %vm58, %v30, 0
    %v69 = vsel %vm58, %v31, 0
    %vm71 = vcmask 1043456
    %v72 = vsel %vm71, %v27, 0
    %v74 = vsel %vm71, %v57, 0
    %76 = vmatprep.subr.mxu0 %v74
    %77 = vmatpush1.msra.mxu0 %v72
    %78 = vmatprep.subr.mxu0 0.0
    %79 = vmatpush1.msra.mxu0 0.0
    %80 = vmatprep.subr.mxu0 0.0
    %81 = vmatpush1.msra.mxu0 0.0
    %82 = vmatprep.subr.mxu0 0.0
    %83 = vmatpush1.msra.mxu0 0.0
    %84 = vmatprep.subr.mxu0 0.0
    %85 = vmatpush1.msra.mxu0 0.0
    %86 = vmatprep.subr.mxu0 0.0
    %87 = vmatpush1.msra.mxu0 0.0
    %88 = vmatprep.subr.mxu0 0.0
    %89 = vmatpush1.msra.mxu0 0.0
    %90 = vmatprep.subr.mxu0 0.0
    %91 = vmatpush1.msra.mxu0 0.0
    %92 = vmatprep.subr.mxu0 0.0
    %93 = vmatpush1.msra.mxu0 0.0
    %94 = vmatprep.subr.mxu0 0.0
    %95 = vmatpush1.msra.mxu0 0.0
    %96 = vmatprep.subr.mxu0 0.0
    %97 = vmatpush1.msra.mxu0 0.0
    %98 = vmatprep.subr.mxu0 0.0
    %99 = vmatpush1.msra.mxu0 0.0
    %100 = vmatprep.subr.mxu0 0.0
    %101 = vmatpush1.msra.mxu0 0.0
    %102 = vmatprep.subr.mxu0 0.0
    %103 = vmatpush1.msra.mxu0 0.0
    %104 = vmatprep.subr.mxu0 0.0
    %105 = vmatpush1.msra.mxu0 0.0
    %106 = vmatprep.subr.mxu0 0.0
    %107 = vmatpush1.msra.mxu0 0.0
    %108 = vmatprep.subr.mxu0 0.0
    %109 = vmatpush1.msra.mxu0 0.0
    %110 = vmatprep.subr.mxu0 0.0
    %111 = vmatpush1.msra.mxu0 0.0
    %112 = vmatprep.subr.mxu0 0.0
    %113 = vmatpush1.msra.mxu0 0.0
    %114 = vmatprep.subr.mxu0 0.0
    %115 = vmatpush1.msra.mxu0 0.0
    %116 = vmatprep.subr.mxu0 0.0
    %117 = vmatpush1.msra.mxu0 0.0
    %118 = vmatprep.subr.mxu0 0.0
    %119 = vmatpush1.msra.mxu0 0.0
    %120 = vmatprep.subr.mxu0 0.0
    %121 = vmatpush1.msra.mxu0 0.0
    %122 = vmatprep.subr.mxu0 0.0
    %123 = vmatpush1.msra.mxu0 0.0
    %124 = vmatprep.subr.mxu0 0.0
    %125 = vmatpush1.msra.mxu0 0.0
    %126 = vmatprep.subr.mxu0 0.0
    %127 = vmatpush1.msra.mxu0 0.0
    %128 = vmatprep.subr.mxu0 0.0
    %129 = vmatpush1.msra.mxu0 0.0
    %130 = vmatprep.subr.mxu0 0.0
    %131 = vmatpush1.msra.mxu0 0.0
    %132 = vmatprep.subr.mxu0 0.0
    %133 = vmatpush1.msra.mxu0 0.0
    %134 = vmatprep.subr.mxu0 0.0
    %135 = vmatpush1.msra.mxu0 0.0
    %136 = vmatprep.subr.mxu0 0.0
    %137 = vmatpush1.msra.mxu0 0.0
    %138 = vmatprep.subr.mxu0 0.0
    %139 = vmatpush1.msra.mxu0 0.0
    %140 = vmatprep.mubr.f32.mxu0 0.0
    %141 = vmatmul.mubr.f32.gmra.mrb[0].mxu0 %v60
    %v142 = vpop.f32.mrb[0].mxu0
    %v143 = vadd.f32 %v39, %v142
    %v144 = vpop.f32.mrb[0].mxu0
    %v145 = vadd.f32 %v39, %v144
    %146 = vmatprep.mubr.f32.mxu0 0.0
    %147 = vmatmul.mubr.f32.gmra.mrb[0].mxu0 %v63
    %v148 = vpop.f32.mrb[0].mxu0
    %v149 = vadd.f32 %v44, %v148
    %v150 = vpop.f32.mrb[0].mxu0
    %v151 = vadd.f32 %v44, %v150
    %152 = vmatprep.mubr.f32.mxu0 0.0
    %153 = vmatmul.mubr.f32.gmra.mrb[0].mxu0 %v66
    %v154 = vpop.f32.mrb[0].mxu0
    %v155 = vadd.f32 %v49, %v154
    %v156 = vpop.f32.mrb[0].mxu0
    %v157 = vadd.f32 %v49, %v156
    %158 = vmatprep.mubr.f32.mxu0 0.0
    %159 = vmatmul.mubr.f32.gmra.mrb[0].mxu0 %v69
    %v160 = vpop.f32.mrb[0].mxu0
    %v161 = vadd.f32 %v54, %v160
    %v162 = vpop.f32.mrb[0].mxu0
    %v163 = vadd.f32 %v54, %v162
    %164 = vdwg.mxu0
    %v165 = vmax.f32 %v143, 0.0
    %v166 = vmax.f32 %v145, 0.0
    %v167 = vmax.f32 %v149, 0.0
    %v168 = vmax.f32 %v151, 0.0
    %v169 = vmax.f32 %v155, 0.0
    %v170 = vmax.f32 %v157, 0.0
    %v171 = vmax.f32 %v161, 0.0
    %v172 = vmax.f32 %v163, 0.0
    %v173 = vld [vmem:[%s3] sm:$0xff]
    %v174 = vld [vmem:[%s3 + $0x8] sm:$0xff]
    %v175 = vld [vmem:[%s3 + $0x10] sm:$0xff]
    %v176 = vld [vmem:[%s3 + $0x18] sm:$0xff]
    %v177 = vld [vmem:[%s4] sm:$0xff]
    %v178 = vld [vmem:[%s4 + $0x8] sm:$0xff]
    %v179 = vld [vmem:[%s4 + $0x10] sm:$0xff]
    %v180 = vld [vmem:[%s4 + $0x18] sm:$0xff]
    %182 = vset.pattern.permute.xlu0 0
    %183 = vperm.xlu0 %182, %v177
    %v184 = vpop.permute.xlu0 %183
    %187 = vset.pattern.permute.xlu0 0
    %188 = vperm.xlu0 %187, %v178
    %v189 = vpop.permute.xlu0 %188
    %192 = vset.pattern.permute.xlu0 0
    %193 = vperm.xlu0 %192, %v179
    %v194 = vpop.permute.xlu0 %193
    %197 = vset.pattern.permute.xlu0 0
    %198 = vperm.xlu0 %197, %v180
    %v199 = vpop.permute.xlu0 %198
    %vm201 = vcmask 261120
    %v203 = vsel %vm201, %v173, 0
    %v206 = vsel %vm201, %v174, 0
    %v209 = vsel %vm201, %v175, 0
    %v212 = vsel %vm201, %v176, 0
    %214 = vmatprep.subr.mxu0 %v166
    %215 = vmatpush1.msra.mxu0 %v165
    %216 = vmatprep.subr.mxu0 %v168
    %217 = vmatpush1.msra.mxu0 %v167
    %218 = vmatprep.subr.mxu0 %v170
    %219 = vmatpush1.msra.mxu0 %v169
    %220 = vmatprep.subr.mxu0 %v172
    %221 = vmatpush1.msra.mxu0 %v171
    %222 = vmatprep.subr.mxu0 0.0
    %223 = vmatpush1.msra.mxu0 0.0
    %224 = vmatprep.subr.mxu0 0.0
    %225 = vmatpush1.msra.mxu0 0.0
    %226 = vmatprep.subr.mxu0 0.0
    %227 = vmatpush1.msra.mxu0 0.0
    %228 = vmatprep.subr.mxu0 0.0
    %229 = vmatpush1.msra.mxu0 0.0
    %230 = vmatprep.subr.mxu0 0.0
    %231 = vmatpush1.msra.mxu0 0.0
    %232 = vmatprep.subr.mxu0 0.0
    %233 = vmatpush1.msra.mxu0 0.0
    %234 = vmatprep.subr.mxu0 0.0
    %235 = vmatpush1.msra.mxu0 0.0
    %236 = vmatprep.subr.mxu0 0.0
    %237 = vmatpush1.msra.mxu0 0.0
    %238 = vmatprep.subr.mxu0 0.0
    %239 = vmatpush1.msra.mxu0 0.0
    %240 = vmatprep.subr.mxu0 0.0
    %241 = vmatpush1.msra.mxu0 0.0
    %242 = vmatprep.subr.mxu0 0.0
    %243 = vmatpush1.msra.mxu0 0.0
    %244 = vmatprep.subr.mxu0 0.0
    %245 = vmatpush1.msra.mxu0 0.0
    %246 = vmatprep.subr.mxu0 0.0
    %247 = vmatpush1.msra.mxu0 0.0
    %248 = vmatprep.subr.mxu0 0.0
    %249 = vmatpush1.msra.mxu0 0.0
    %250 = vmatprep.subr.mxu0 0.0
    %251 = vmatpush1.msra.mxu0 0.0
    %252 = vmatprep.subr.mxu0 0.0
    %253 = vmatpush1.msra.mxu0 0.0
    %254 = vmatprep.subr.mxu0 0.0
    %255 = vmatpush1.msra.mxu0 0.0
    %256 = vmatprep.subr.mxu0 0.0
    %257 = vmatpush1.msra.mxu0 0.0
    %258 = vmatprep.subr.mxu0 0.0
    %259 = vmatpush1.msra.mxu0 0.0
    %260 = vmatprep.subr.mxu0 0.0
    %261 = vmatpush1.msra.mxu0 0.0
    %262 = vmatprep.subr.mxu0 0.0
    %263 = vmatpush1.msra.mxu0 0.0
    %264 = vmatprep.subr.mxu0 0.0
    %265 = vmatpush1.msra.mxu0 0.0
    %266 = vmatprep.subr.mxu0 0.0
    %267 = vmatpush1.msra.mxu0 0.0
    %268 = vmatprep.subr.mxu0 0.0
    %269 = vmatpush1.msra.mxu0 0.0
    %270 = vmatprep.subr.mxu0 0.0
    %271 = vmatpush1.msra.mxu0 0.0
    %272 = vmatprep.subr.mxu0 0.0
    %273 = vmatpush1.msra.mxu0 0.0
    %274 = vmatprep.subr.mxu0 0.0
    %275 = vmatpush1.msra.mxu0 0.0
    %276 = vmatprep.subr.mxu0 0.0
    %277 = vmatpush1.msra.mxu0 0.0
    %278 = vmatprep.mubr.f32.mxu0 0.0
    %279 = vmatmul.mubr.f32.gmra.mrb[0].mxu0 %v203
    %v280 = vpop.f32.mrb[0].mxu0
    %v281 = vadd.f32 %v184, %v280
    %v282 = vpop.f32.mrb[0].mxu0
    %v283 = vadd.f32 %v184, %v282
    %284 = vmatprep.mubr.f32.mxu0 0.0
    %285 = vmatmul.mubr.f32.gmra.mrb[0].mxu0 %v206
    %v286 = vpop.f32.mrb[0].mxu0
    %v287 = vadd.f32 %v189, %v286
    %v288 = vpop.f32.mrb[0].mxu0
    %v289 = vadd.f32 %v189, %v288
    %290 = vmatprep.mubr.f32.mxu0 0.0
    %291 = vmatmul.mubr.f32.gmra.mrb[0].mxu0 %v209
    %v292 = vpop.f32.mrb[0].mxu0
    %v293 = vadd.f32 %v194, %v292
    %v294 = vpop.f32.mrb[0].mxu0
    %v295 = vadd.f32 %v194, %v294
    %296 = vmatprep.mubr.f32.mxu0 0.0
    %297 = vmatmul.mubr.f32.gmra.mrb[0].mxu0 %v212
    %v298 = vpop.f32.mrb[0].mxu0
    %v299 = vadd.f32 %v199, %v298
    %v300 = vpop.f32.mrb[0].mxu0
    %v301 = vadd.f32 %v199, %v300
    %302 = vdwg.mxu0
    %v303 = vmax.f32 %v281, 0.0
    %v304 = vmax.f32 %v283, 0.0
    %v305 = vmax.f32 %v287, 0.0
    %v306 = vmax.f32 %v289, 0.0
    %v307 = vmax.f32 %v293, 0.0
    %v308 = vmax.f32 %v295, 0.0
    %v309 = vmax.f32 %v299, 0.0
    %v310 = vmax.f32 %v301, 0.0
    %v311 = vld [vmem:[%s5] sm:$0x3]
    %v312 = vld [vmem:[%s6] sm:$0x3]
    %314 = vset.pattern.permute.xlu0 0
    %315 = vperm.xlu0 %314, %v312
    %v316 = vpop.permute.xlu0 %315
    %v319 = vsel %vm201, %v311, 0
    %321 = vmatprep.subr.mxu0 %v304
    %322 = vmatpush1.msra.mxu0 %v303
    %323 = vmatprep.subr.mxu0 %v306
    %324 = vmatpush1.msra.mxu0 %v305
    %325 = vmatprep.subr.mxu0 %v308
    %326 = vmatpush1.msra.mxu0 %v307
    %327 = vmatprep.subr.mxu0 %v310
    %328 = vmatpush1.msra.mxu0 %v309
    %329 = vmatprep.subr.mxu0 0.0
    %330 = vmatpush1.msra.mxu0 0.0
    %331 = vmatprep.subr.mxu0 0.0
    %332 = vmatpush1.msra.mxu0 0.0
    %333 = vmatprep.subr.mxu0 0.0
    %334 = vmatpush1.msra.mxu0 0.0
    %335 = vmatprep.subr.mxu0 0.0
    %336 = vmatpush1.msra.mxu0 0.0
    %337 = vmatprep.subr.mxu0 0.0
    %338 = vmatpush1.msra.mxu0 0.0
    %339 = vmatprep.subr.mxu0 0.0
    %340 = vmatpush1.msra.mxu0 0.0
    %341 = vmatprep.subr.mxu0 0.0
    %342 = vmatpush1.msra.mxu0 0.0
    %343 = vmatprep.subr.mxu0 0.0
    %344 = vmatpush1.msra.mxu0 0.0
    %345 = vmatprep.subr.mxu0 0.0
    %346 = vmatpush1.msra.mxu0 0.0
    %347 = vmatprep.subr.mxu0 0.0
    %348 = vmatpush1.msra.mxu0 0.0
    %349 = vmatprep.subr.mxu0 0.0
    %350 = vmatpush1.msra.mxu0 0.0
    %351 = vmatprep.subr.mxu0 0.0
    %352 = vmatpush1.msra.mxu0 0.0
    %353 = vmatprep.subr.mxu0 0.0
    %354 = vmatpush1.msra.mxu0 0.0
    %355 = vmatprep.subr.mxu0 0.0
    %356 = vmatpush1.msra.mxu0 0.0
    %357 = vmatprep.subr.mxu0 0.0
    %358 = vmatpush1.msra.mxu0 0.0
    %359 = vmatprep.subr.mxu0 0.0
    %360 = vmatpush1.msra.mxu0 0.0
    %361 = vmatprep.subr.mxu0 0.0
    %362 = vmatpush1.msra.mxu0 0.0
    %363 = vmatprep.subr.mxu0 0.0
    %364 = vmatpush1.msra.mxu0 0.0
    %365 = vmatprep.subr.mxu0 0.0
    %366 = vmatpush1.msra.mxu0 0.0
    %367 = vmatprep.subr.mxu0 0.0
    %368 = vmatpush1.msra.mxu0 0.0
    %369 = vmatprep.subr.mxu0 0.0
    %370 = vmatpush1.msra.mxu0 0.0
    %371 = vmatprep.subr.mxu0 0.0
    %372 = vmatpush1.msra.mxu0 0.0
    %373 = vmatprep.subr.mxu0 0.0
    %374 = vmatpush1.msra.mxu0 0.0
    %375 = vmatprep.subr.mxu0 0.0
    %376 = vmatpush1.msra.mxu0 0.0
    %377 = vmatprep.subr.mxu0 0.0
    %378 = vmatpush1.msra.mxu0 0.0
    %379 = vmatprep.subr.mxu0 0.0
    %380 = vmatpush1.msra.mxu0 0.0
    %381 = vmatprep.subr.mxu0 0.0
    %382 = vmatpush1.msra.mxu0 0.0
    %383 = vmatprep.subr.mxu0 0.0
    %384 = vmatpush1.msra.mxu0 0.0
    %385 = vmatprep.mubr.f32.mxu0 0.0
    %386 = vmatmul.mubr.f32.gmra.mrb[0].mxu0 %v319
    %v387 = vpop.f32.mrb[0].mxu0
    %v388 = vadd.f32 %v316, %v387
    %v389 = vpop.f32.mrb[0].mxu0
    %v390 = vadd.f32 %v316, %v389
    %391 = vdwg.mxu0
    %v394 = vcombine.low %v388, %v390
    %v396 = vunpack.c.l.s4 1983009808
    %v397 = vunpack.c.0.s8 %v396
    %v398 = vlaneseq
    %v399 = vshrl.u32 %v398, 7
    %v400 = vsub.s32 %v397, %v399
    %v401 = vrot.slane %v394, %v400
    %403 = vst [vmem:[#allocation2] sm:$0xf] %v401
    // Predicated region
    $region30: #{tpu_custom_call.1} parent=1 // pred_check
      _
    $region31: #{tpu_custom_call.1} parent=1 // pred_check_branch
      %405 = sbr.rel (0) target = $region33
    $region32: #{tpu_custom_call.1} parent=1 // pred_region
      %s407 = ssub.s32 64, 64
      %408 = vsyncadd [#allocation3], %s407
      %s410 = sshll.u32 [#allocation2], 4
      %s411 = int_to_ptr.vmem [resolvable:$true] %s410
      %413 = dma.vmem_to_hbm [thread:$0]  %s411, 64, %s7, [#allocation3]
    $region33: #{tpu_custom_call.1} parent=1 // pred_fallthru
      _
    // Predicated region
    $region34: #{tpu_custom_call.1} parent=1 // pred_check
      _
    $region35: #{tpu_custom_call.1} parent=1 // pred_check_branch
      %415 = sbr.rel (0) target = $region37
    $region36: #{tpu_custom_call.1} parent=1 // pred_region
      %416 = dma.done [#allocation3], 64
    $region37: #{tpu_custom_call.1} parent=1 // pred_fallthru
      _
    %417 = vsyncpa [#allocation3], 1

</llo_original>
